<compile_context>
chip_gen: v7x
topology: tpu7x:2x2x1
jax: 0.10.0
libtpu: 0.0.40
codegen_flags: <defaults>
</compile_context>

<pallas_src>
import jax
import jax.numpy as jnp
from jax import lax
from jax.experimental import pallas as pl
from jax.experimental.pallas import tpu as pltpu


_NBUF = 16                      # in-flight DMA depth for the HBM gather path
_DEFAULT_TILE_TOKENS = 512      # rows per grid step
_DEFAULT_ONEHOT_MAX_VOCAB = 2048  # one-hot MXU path only for small vocabularies


def _round_up(x, m):
    return ((x + m - 1) // m) * m


def _vmem_limit_bytes():
    """Generation-aware scoped-VMEM limit (leave headroom for compiler scratch)."""
    cap = 64 * 1024 * 1024          # conservative fallback (v7x per-TC VMEM)
    try:
        cap = int(pltpu.get_tpu_info().vmem_capacity_bytes)
    except Exception:
        pass
    return max(32 * 1024 * 1024, min(cap - 16 * 1024 * 1024, 100 * 1024 * 1024))


# ---------------------------------------------------------------------------
# Path A: VMEM-resident table, vectorized one-hot MXU gather.
# ---------------------------------------------------------------------------
def _embedding_onehot_kernel(idx_ref, table_ref, out_ref):
    # idx_ref:   (T, 1) int32 token ids for this tile (VMEM block)
    # table_ref: (V, D) embedding table, VMEM-resident (constant index_map)
    # out_ref:   (T, D) output block
    t_rows = out_ref.shape[0]
    vocab = table_ref.shape[0]
    idx = idx_ref[...]                                           # (T, 1)
    col = lax.broadcasted_iota(jnp.int32, (t_rows, vocab), 1)    # (T, V)
    onehot = (col == idx).astype(table_ref.dtype)                # (T, V)
    acc = jnp.dot(onehot, table_ref[...],
                  preferred_element_type=jnp.float32)            # (T, D) on MXU
    out_ref[...] = acc.astype(out_ref.dtype)


# ---------------------------------------------------------------------------
# Path B: table stays in HBM; rows DMA'd directly into the output block.
# ---------------------------------------------------------------------------
def _embedding_hbm_gather_kernel(n_tok_ref, idx_ref, table_hbm, out_ref, sem):
    # n_tok_ref: (1,)    int32 SMEM (scalar prefetch): true token count
    # idx_ref:   (n_pad,) int32 SMEM (scalar prefetch): token ids
    # table_hbm: (V, D)  raw HBM ref (memory_space=pl.ANY)
    # out_ref:   (T, D)  output block (VMEM)
    # sem:       (NBUF,) DMA semaphores
    t_rows = out_ref.shape[0]
    base = pl.program_id(0) * t_rows
    # Only gather real tokens on the tail tile; padded rows are never touched.
    valid = jnp.clip(n_tok_ref[0] - base, 0, t_rows)

    def wait_slot(slot):
        # Same-shaped descriptor as the issued (1, D) row copy.
        pltpu.make_async_copy(
            table_hbm.at[pl.ds(0, 1), :],
            out_ref.at[pl.ds(0, 1), :],
            sem.at[slot],
        ).wait()

    def body(t, carry):
        # Read the token id from SMEM *before* any DMA wait (keeps sst->sld
        # forwarding; .wait() would otherwise stall the scalar read).
        row = idx_ref[base + t]
        slot = t & (_NBUF - 1)

        @pl.when(t >= _NBUF)
        def _():
            wait_slot(slot)          # row (t - NBUF) has landed in out_ref

        pltpu.make_async_copy(
            table_hbm.at[pl.ds(row, 1), :],
            out_ref.at[pl.ds(t, 1), :],
            sem.at[slot],
        ).start()
        return carry

    lax.fori_loop(0, valid, body, 0)

    # Drain the up-to-NBUF copies still in flight before the body ends so the
    # pipeline writeback sees the gathered rows.
    outstanding = jnp.minimum(valid, _NBUF)

    def drain(i, carry):
        t = valid - outstanding + i
        wait_slot(t & (_NBUF - 1))
        return carry

    lax.fori_loop(0, outstanding, drain, 0)


# ---------------------------------------------------------------------------
# Wrapper
# ---------------------------------------------------------------------------
def embedding_lookup(indices, embedding_table, *,
                     tile_tokens=_DEFAULT_TILE_TOKENS,
                     onehot_max_vocab=_DEFAULT_ONEHOT_MAX_VOCAB,
                     force_hbm_gather=False):
    """indices: int [...], embedding_table: [V, D] -> [..., D]."""
    orig_shape = indices.shape
    flat_idx = indices.reshape(-1).astype(jnp.int32)
    n_tokens = int(flat_idx.shape[0])
    vocab, dim = embedding_table.shape
    itemsize = jnp.dtype(embedding_table.dtype).itemsize

    # Clamp to avoid OOB DMAs (torch.nn.Embedding raises; we clamp for safety).
    flat_idx = jnp.clip(flat_idx, 0, vocab - 1)

    # Token tile: sublane-friendly multiple of 8, capped at tile_tokens.
    t_rows = min(_round_up(n_tokens, 8), _round_up(tile_tokens, 8))
    n_pad = _round_up(n_tokens, t_rows)
    if n_pad != n_tokens:
        flat_idx = jnp.pad(flat_idx, (0, n_pad - n_tokens))
    n_tiles = n_pad // t_rows

    vmem_limit = _vmem_limit_bytes()
    table_bytes = vocab * dim * itemsize
    out_tile_bytes = t_rows * dim * itemsize
    # Resident table is double-buffered by the pipeline (we don't rely on
    # pl.Buffered(1)); leave room for the double-buffered output tile, the
    # (T, V) one-hot temp and the f32 accumulator, plus slack.
    onehot_fits = (
        2 * table_bytes + 2 * out_tile_bytes
        + t_rows * vocab * itemsize + t_rows * dim * 4
        + (4 << 20)
    ) <= vmem_limit
    use_onehot = (
        (not force_hbm_gather)
        and vocab <= onehot_max_vocab
        and jnp.issubdtype(embedding_table.dtype, jnp.floating)
        and onehot_fits
    )

    compiler_params = pltpu.CompilerParams(
        dimension_semantics=("parallel",),   # shard token tiles across TCs
        vmem_limit_bytes=vmem_limit,
    )
    out_shape = jax.ShapeDtypeStruct((n_pad, dim), embedding_table.dtype)

    if use_onehot:
        idx_2d = flat_idx.reshape(n_pad, 1)
        grid_spec = pltpu.PrefetchScalarGridSpec(
            num_scalar_prefetch=0,
            grid=(n_tiles,),
            in_specs=[
                pl.BlockSpec((t_rows, 1), lambda i: (i, 0)),      # tile token ids
                pl.BlockSpec((vocab, dim), lambda i: (0, 0)),     # resident table
            ],
            out_specs=pl.BlockSpec((t_rows, dim), lambda i: (i, 0)),
        )
        cost = pl.CostEstimate(
            flops=2 * n_pad * vocab * dim,
            transcendentals=0,
            bytes_accessed=int(n_pad * 4 + table_bytes + n_pad * dim * itemsize),
        )
        out_flat = pl.pallas_call(
            _embedding_onehot_kernel,
            out_shape=out_shape,
            grid_spec=grid_spec,
            compiler_params=compiler_params,
            cost_estimate=cost,
        )(idx_2d, embedding_table)
    else:
        # TODO(synk): for extremely large token counts, replace the whole-array
        # scalar prefetch with per-tile SMEM index blocks to bound SMEM use.
        n_tok_arr = jnp.array([n_tokens], dtype=jnp.int32)
        grid_spec = pltpu.PrefetchScalarGridSpec(
            num_scalar_prefetch=2,                     # (n_tokens, flat_idx)
            grid=(n_tiles,),
            in_specs=[pl.BlockSpec(memory_space=pl.ANY)],   # raw HBM table
            out_specs=pl.BlockSpec((t_rows, dim), lambda i, n_tok, idx: (i, 0)),
            scratch_shapes=[pltpu.SemaphoreType.DMA((_NBUF,))],
        )
        cost = pl.CostEstimate(
            flops=0,
            transcendentals=0,
            # Gather only touches n_tokens rows (read + write) plus the indices.
            bytes_accessed=int(n_pad * 4 + 2 * n_tokens * dim * itemsize),
        )
        out_flat = pl.pallas_call(
            _embedding_hbm_gather_kernel,
            out_shape=out_shape,
            grid_spec=grid_spec,
            compiler_params=compiler_params,
            cost_estimate=cost,
        )(n_tok_arr, flat_idx, embedding_table)

    if n_pad != n_tokens:
        out_flat = out_flat[:n_tokens]
    return out_flat.reshape(*orig_shape, dim)


class Embedding:
    """JAX/Pallas port of the PyTorch Embedding module (forward only)."""

    def __init__(self, pretrained_embedding=None, embedding_shape=None,
                 trainable=True, init_scale=0.02, key=None):
        if pretrained_embedding is None and embedding_shape is None:
            raise ValueError(
                "At least one of pretrained_embedding and embedding_shape "
                "must be specified!")
        if pretrained_embedding is None:
            if key is None:
                key = jax.random.PRNGKey(0)
            self.weight = jax.random.uniform(
                key, embedding_shape, dtype=jnp.float32,
                minval=-init_scale, maxval=init_scale)
        else:
            self.weight = jnp.asarray(pretrained_embedding)
        # TODO(synk): `trainable` only affects gradients; the forward pass is identical.
        self.trainable = trainable

    def __call__(self, indices):
        return embedding_lookup(indices, self.weight)


if __name__ == "__main__":
    key = jax.random.PRNGKey(0)
    k_emb, k_idx = jax.random.split(key)

    vocab, dim = 50, 128   # small synthetic table; dim lane-aligned (128)
    batch, seq = 2, 8

    emb = Embedding(embedding_shape=(vocab, dim), init_scale=0.02, key=k_emb)
    indices = jax.random.randint(k_idx, (batch, seq), 0, vocab, dtype=jnp.int32)

    ref = emb.weight[indices]

    # Fast path: VMEM-resident table, one-hot MXU gather.
    out = jax.block_until_ready(emb(indices))
    assert out.shape == (batch, seq, dim), out.shape
    assert jnp.allclose(out, ref), "mismatch vs reference gather (one-hot path)"

    # Large-table path: direct HBM->output-block DMA row gather (forced here to
    # exercise it on the small demo table).
    out_hbm = jax.block_until_ready(
        embedding_lookup(indices, emb.weight, force_hbm_gather=True))
    assert jnp.allclose(out_hbm, ref), "mismatch vs reference gather (HBM path)"

    print("KERNEL_OK")
</pallas_src>

<mosaic_0001>
module attributes {stable_mosaic.version = 11 : i64} {
  func.func @_embedding_onehot_kernel(%arg0: i32, %arg1: memref<16x1xi32, #tpu.memory_space<vmem>>, %arg2: memref<50x128xf32, #tpu.memory_space<vmem>>, %arg3: memref<16x128xf32, #tpu.memory_space<vmem>>) attributes {dimension_semantics = [#tpu.dimension_semantics<parallel>], iteration_bounds = array<i64: 1>, scalar_prefetch = 0 : i64, scratch_operands = 0 : i64, tpu.core_type = #tpu.core_type<tc>, window_params = [{transform_indices = @transform_0, window_bounds = array<i64: 16, 1>}, {pipeline_mode = #tpu.pipeline_mode<synchronous>, transform_indices = @transform_1, window_bounds = array<i64: 50, 128>}, {transform_indices = @transform_2, window_bounds = array<i64: 16, 128>}]} {
    %c0 = arith.constant 0 : index
    %c0_0 = arith.constant 0 : index
    %0 = vector.load %arg1[%c0, %c0_0] : memref<16x1xi32, #tpu.memory_space<vmem>>, vector<16x1xi32>
    %1 = tpu.iota {dimensions = array<i32: 1>} : vector<16x50xi32>
    %2 = vector.broadcast %0 : vector<16x1xi32> to vector<16x50xi32>
    %3 = arith.cmpi eq, %1, %2 : vector<16x50xi32>
    %4 = arith.extui %3 : vector<16x50xi1> to vector<16x50xi32>
    %5 = arith.sitofp %4 : vector<16x50xi32> to vector<16x50xf32>
    %c0_1 = arith.constant 0 : index
    %c0_2 = arith.constant 0 : index
    %6 = vector.load %arg2[%c0_1, %c0_2] : memref<50x128xf32, #tpu.memory_space<vmem>>, vector<50x128xf32>
    %cst = arith.constant dense<0.000000e+00> : vector<16x128xf32>
    %7 = tpu.matmul %5, %6, %cst {dimension_numbers = #tpu.dot_dimension_numbers<[1], [0], [0], [1], [0, 0, 1, 1], [], []>} : vector<16x50xf32>, vector<50x128xf32>, vector<16x128xf32> -> vector<16x128xf32>
    %c0_3 = arith.constant 0 : index
    %c0_4 = arith.constant 0 : index
    %8 = vector.load %arg3[%c0_3, %c0_4] : memref<16x128xf32, #tpu.memory_space<vmem>>, vector<16x128xf32>
    tpu.vector_store %arg3[%c0_3, %c0_4], %7 {strides = array<i32>} : memref<16x128xf32, #tpu.memory_space<vmem>>, vector<16x128xf32>,
    return
  }
  func.func @transform_0(%arg0: i32) -> (i32, i32) {
    %c0_i32 = arith.constant 0 : i32
    %c0_i32_0 = arith.constant 0 : i32
    return %arg0, %c0_i32 : i32, i32
  }
  func.func @transform_1(%arg0: i32) -> (i32, i32) {
    %c0_i32 = arith.constant 0 : i32
    %c0_i32_0 = arith.constant 0 : i32
    %c0_i32_1 = arith.constant 0 : i32
    return %c0_i32, %c0_i32_0 : i32, i32
  }
  func.func @transform_2(%arg0: i32) -> (i32, i32) {
    %c0_i32 = arith.constant 0 : i32
    %c0_i32_0 = arith.constant 0 : i32
    return %arg0, %c0_i32 : i32, i32
  }
}

</mosaic_0001>

<llo_original>
// kernel: tpu_custom_call.1
$region0: #{tpu_custom_call.1}
  #allocation0 [shape = 'u32[]', space=smem, size = 0x4, offset = 0x4, fixed_abs, tag = 'smem constant byte address 0x4 - core index']
  #allocation1 [shape = 'u32[144,128]{1,0:T(1,128)}', space=vmem, size = 0x12000, scoped, tag = 'internal scratch']
  %s0 = inlined_call_operand.vmem [shape: s32[16,1], index: 0, kind: input, shape index: {}]
  %s1 = inlined_call_operand.hbm [shape: f32[50,128], index: 1, kind: input, shape index: {}]
  %s2 = inlined_call_operand.hbm [shape: f32[16,128], index: 2, kind: output, shape index: {}]
  %s3 = sld [smem:[#allocation0]]
  $region22: #{tpu_custom_call.1} parent=0
    _
  %s5 = ssub.s32 1, %s3
  %s6 = scalar_select 0, %s5, %s3
  $region1: #{tpu_custom_call.1} parent=0
    #allocation2 [shape = 'u8[28672]{0}', space=vmem, size = 0x7000, scoped, tag = 'input window, operand 1, single buffered']
    #allocation3 [shape = 's32[1]{0}', space=sflag, size = 0x4, scoped, tag = 'scoped memory for tpu_custom_call.1']
    #allocation4 [shape = 's32[1]{0}', space=sflag, size = 0x4, scoped, tag = 'scoped memory for tpu_custom_call.1']
    #allocation5 [shape = 'u8[8192]{0}', space=vmem, size = 0x2000, scoped, tag = 'output window, operand 0, single buffered']
    %7 = vsyncpa [#allocation3], 0
    %8 = vsyncpa [#allocation4], 0
    // Predicated region
    $region2: #{tpu_custom_call.1} parent=1 // pred_check
      _
    $region3: #{tpu_custom_call.1} parent=1 // pred_check_branch
      %10 = sbr.rel (0) target = $region5
    $region4: #{tpu_custom_call.1} parent=1 // pred_region
      _
    $region5: #{tpu_custom_call.1} parent=1 // pred_fallthru
      _
    // Predicated region
    $region6: #{tpu_custom_call.1} parent=1 // pred_check
      _
    $region7: #{tpu_custom_call.1} parent=1 // pred_check_branch
      %12 = sbr.rel (0) target = $region9
    $region8: #{tpu_custom_call.1} parent=1 // pred_region
      %s14 = ssub.s32 896, 896
      %15 = vsyncadd [#allocation3], %s14
      %s16 = sshll.u32 [#allocation2], 4
      %s17 = int_to_ptr.vmem [resolvable:$true] %s16
      %22 = dma.hbm_to_vmem [thread:$0]  %s1, 896, %s17, [#allocation3], 128, 128, 8
    $region9: #{tpu_custom_call.1} parent=1 // pred_fallthru
      _
    // Predicated region
    $region10: #{tpu_custom_call.1} parent=1 // pred_check
      _
    $region11: #{tpu_custom_call.1} parent=1 // pred_check_branch
      %24 = sbr.rel (0) target = $region13
    $region12: #{tpu_custom_call.1} parent=1 // pred_region
      %25 = dma.done [#allocation3], 896
    $region13: #{tpu_custom_call.1} parent=1 // pred_fallthru
      _
    %v26 = vld [vmem:[%s0] sm:$0xff]
    %v27 = vld [vmem:[%s0 + $0x8] sm:$0xff]
    %v28 = vlaneseq
    %v29 = vand.u32 %v28, 127
    %30 = vset.pattern.permute.xlu0 0
    %31 = vperm.xlu0 %30, %v26
    %v32 = vpop.permute.xlu0 %31
    %33 = vset.pattern.permute.xlu0 0
    %34 = vperm.xlu0 %33, %v27
    %v35 = vpop.permute.xlu0 %34
    %vm36 = vcmp.eq.s32.totalorder %v29, %v32
    %vm37 = vcmp.eq.s32.totalorder %v29, %v35
    %v38 = vsel %vm36, 1, 0
    %v39 = vsel %vm37, 1, 0
    %v40 = vcvt.s32.f32 %v38
    %v41 = vcvt.s32.f32 %v39
    %v42 = vld [vmem:[#allocation2] sm:$0xff]
    %v43 = vld [vmem:[#allocation2 + $0x8] sm:$0xff]
    %v44 = vld [vmem:[#allocation2 + $0x10] sm:$0xff]
    %v45 = vld [vmem:[#allocation2 + $0x18] sm:$0xff]
    %v46 = vld [vmem:[#allocation2 + $0x20] sm:$0xff]
    %v47 = vld [vmem:[#allocation2 + $0x28] sm:$0xff]
    %v48 = vld [vmem:[#allocation2 + $0x30] sm:$0x3]
    %vm49 = vcmask 408576
    %v51 = vsel %vm49, %v40, 0
    %v54 = vsel %vm49, %v41, 0
    %vm56 = vcmask 1041408
    %v58 = vsel %vm56, %v48, 0
    %60 = vmatprep.subr.mxu0 0.0
    %61 = vmatpush1.msra.mxu0 %v42
    %62 = vmatprep.subr.mxu0 0.0
    %63 = vmatpush1.msra.mxu0 %v43
    %64 = vmatprep.subr.mxu0 0.0
    %65 = vmatpush1.msra.mxu0 %v44
    %66 = vmatprep.subr.mxu0 0.0
    %67 = vmatpush1.msra.mxu0 %v45
    %68 = vmatprep.subr.mxu0 0.0
    %69 = vmatpush1.msra.mxu0 %v46
    %70 = vmatprep.subr.mxu0 0.0
    %71 = vmatpush1.msra.mxu0 %v47
    %72 = vmatprep.subr.mxu0 0.0
    %73 = vmatpush1.msra.mxu0 %v58
    %74 = vmatprep.subr.mxu0 0.0
    %75 = vmatpush1.msra.mxu0 0.0
    %76 = vmatprep.subr.mxu0 0.0
    %77 = vmatpush1.msra.mxu0 0.0
    %78 = vmatprep.subr.mxu0 0.0
    %79 = vmatpush1.msra.mxu0 0.0
    %80 = vmatprep.subr.mxu0 0.0
    %81 = vmatpush1.msra.mxu0 0.0
    %82 = vmatprep.subr.mxu0 0.0
    %83 = vmatpush1.msra.mxu0 0.0
    %84 = vmatprep.subr.mxu0 0.0
    %85 = vmatpush1.msra.mxu0 0.0
    %86 = vmatprep.subr.mxu0 0.0
    %87 = vmatpush1.msra.mxu0 0.0
    %88 = vmatprep.subr.mxu0 0.0
    %89 = vmatpush1.msra.mxu0 0.0
    %90 = vmatprep.subr.mxu0 0.0
    %91 = vmatpush1.msra.mxu0 0.0
    %92 = vmatprep.subr.mxu0 0.0
    %93 = vmatpush1.msra.mxu0 0.0
    %94 = vmatprep.subr.mxu0 0.0
    %95 = vmatpush1.msra.mxu0 0.0
    %96 = vmatprep.subr.mxu0 0.0
    %97 = vmatpush1.msra.mxu0 0.0
    %98 = vmatprep.subr.mxu0 0.0
    %99 = vmatpush1.msra.mxu0 0.0
    %100 = vmatprep.subr.mxu0 0.0
    %101 = vmatpush1.msra.mxu0 0.0
    %102 = vmatprep.subr.mxu0 0.0
    %103 = vmatpush1.msra.mxu0 0.0
    %104 = vmatprep.subr.mxu0 0.0
    %105 = vmatpush1.msra.mxu0 0.0
    %106 = vmatprep.subr.mxu0 0.0
    %107 = vmatpush1.msra.mxu0 0.0
    %108 = vmatprep.subr.mxu0 0.0
    %109 = vmatpush1.msra.mxu0 0.0
    %110 = vmatprep.subr.mxu0 0.0
    %111 = vmatpush1.msra.mxu0 0.0
    %112 = vmatprep.subr.mxu0 0.0
    %113 = vmatpush1.msra.mxu0 0.0
    %114 = vmatprep.subr.mxu0 0.0
    %115 = vmatpush1.msra.mxu0 0.0
    %116 = vmatprep.subr.mxu0 0.0
    %117 = vmatpush1.msra.mxu0 0.0
    %118 = vmatprep.subr.mxu0 0.0
    %119 = vmatpush1.msra.mxu0 0.0
    %120 = vmatprep.subr.mxu0 0.0
    %121 = vmatpush1.msra.mxu0 0.0
    %122 = vmatprep.subr.mxu0 0.0
    %123 = vmatpush1.msra.mxu0 0.0
    %124 = vmatprep.mubr.f32.mxu0 0.0
    %125 = vmatmul.mubr.f32.gmra.mrb[0].mxu0 %v51
    %v126 = vpop.f32.mrb[0].mxu0
    %v127 = vadd.f32 0.0, %v126
    %v128 = vpop.f32.mrb[0].mxu0
    %129 = vmatprep.mubr.f32.mxu0 0.0
    %130 = vmatmul.mubr.f32.gmra.mrb[0].mxu0 %v54
    %v131 = vpop.f32.mrb[0].mxu0
    %v132 = vadd.f32 0.0, %v131
    %v133 = vpop.f32.mrb[0].mxu0
    %134 = vdwg.mxu0
    %135 = vst [vmem:[#allocation5] sm:$0xff] %v127
    %136 = vst [vmem:[#allocation5 + $0x8] sm:$0xff] %v132
    // Predicated region
    $region14: #{tpu_custom_call.1} parent=1 // pred_check
      _
    $region15: #{tpu_custom_call.1} parent=1 // pred_check_branch
      %138 = sbr.rel (0) target = $region17
    $region16: #{tpu_custom_call.1} parent=1 // pred_region
      %s140 = ssub.s32 256, 256
      %141 = vsyncadd [#allocation4], %s140
      %s142 = sshll.u32 [#allocation5], 4
      %s143 = int_to_ptr.vmem [resolvable:$true] %s142
      %148 = dma.vmem_to_hbm [thread:$0]  %s143, 256, %s2, [#allocation4], 128, 128, 8
    $region17: #{tpu_custom_call.1} parent=1 // pred_fallthru
      _
    // Predicated region
    $region18: #{tpu_custom_call.1} parent=1 // pred_check
      _
    $region19: #{tpu_custom_call.1} parent=1 // pred_check_branch
      %150 = sbr.rel (0) target = $region21
    $region20: #{tpu_custom_call.1} parent=1 // pred_region
      %151 = dma.done [#allocation4], 256
    $region21: #{tpu_custom_call.1} parent=1 // pred_fallthru
      _
    %152 = vsyncpa [#allocation3], 1
    %153 = vsyncpa [#allocation4], 1

</llo_original>
